<compile_context>
chip_gen: v5e
topology: v5e:2x2
jax: 0.10.0
libtpu: 0.0.40
codegen_flags: <defaults>
</compile_context>

<pallas_src>
import jax
import jax.numpy as jnp
from jax.experimental import pallas as pl
from jax.experimental.pallas import tpu as pltpu


def _round_up(n, m):
    return ((n + m - 1) // m) * m


def _const_spec(shape):
    """BlockSpec for an operand fetched once (constant index_map), single-buffered."""
    index_map = lambda i: (0,) * len(shape)
    try:
        return pl.BlockSpec(shape, index_map, pipeline_mode=pl.Buffered(1))
    except TypeError:  # older BlockSpec signature without pipeline_mode
        return pl.BlockSpec(shape, index_map)


def mlp_head_kernel(x_ref, w1_ref, b1_ref, w2_ref, b2_ref, w3t_ref, b3t_ref, o_ref):
    # One batch tile, everything resident in VMEM. Matmuls run in bf16 on the
    # MXU with f32 accumulation; bias add + ReLU stay in f32.
    x = x_ref[...].astype(w1_ref.dtype)                 # f32 -> bf16 cast on VPU

    h1 = jnp.dot(x, w1_ref[...], preferred_element_type=jnp.float32) + b1_ref[...]
    h1 = jnp.maximum(h1, 0.0).astype(w2_ref.dtype)      # ReLU -> bf16

    h2 = jnp.dot(h1, w2_ref[...], preferred_element_type=jnp.float32) + b2_ref[...]
    h2 = jnp.maximum(h2, 0.0).astype(w3t_ref.dtype)     # ReLU -> bf16

    # out^T = w3^T @ h2^T : contract the hidden axis of w3_t (Op, Hp) with the
    # hidden axis of h2 (bm, Hp) -> (Op, bm). Keeps the HBM writeback lane-dense
    # along the batch axis instead of a zero-padded 128-wide OUT axis.
    out_t = jax.lax.dot_general(
        w3t_ref[...], h2,
        dimension_numbers=(((1,), (1,)), ((), ())),
        preferred_element_type=jnp.float32)
    o_ref[...] = out_t + b3t_ref[...]                   # (Op, bm) f32


def prepare_params(params, *, compute_dtype=jnp.bfloat16, lane_align=128, out_pad=8):
    """Pad + cast weights once (hoisted out of the per-call wrapper).

    params: w1 (K,H), b1 (1,H), w2 (H,H), b2 (1,H), w3 (H,OUT), b3 (1,OUT).
    """
    K, H = params["w1"].shape
    OUT = params["w3"].shape[1]
    Kp = _round_up(max(K, 1), lane_align)
    Hp = _round_up(max(H, 1), lane_align)
    Op = _round_up(max(OUT, 1), out_pad)     # OUT=2 -> 8 sublanes (transposed store)

    def pad2(a, rows, cols, dtype):
        return jnp.pad(a, ((0, rows - a.shape[0]), (0, cols - a.shape[1]))).astype(dtype)

    w3t = jnp.pad(params["w3"], ((0, Hp - H), (0, Op - OUT))).T       # (Op, Hp)
    b3t = jnp.pad(params["b3"], ((0, 0), (0, Op - OUT))).T            # (Op, 1)

    return {
        "w1": pad2(params["w1"], Kp, Hp, compute_dtype),
        "b1": pad2(params["b1"], 1, Hp, jnp.float32),
        "w2": pad2(params["w2"], Hp, Hp, compute_dtype),
        "b2": pad2(params["b2"], 1, Hp, jnp.float32),
        "w3t": w3t.astype(compute_dtype),
        "b3t": b3t.astype(jnp.float32),
        "dims": (K, H, OUT, Kp, Hp, Op),
    }


def _choose_bm(B, Kp, bm):
    if B <= 128:
        # Single small tile; 16-row granularity keeps bf16 intermediates
        # sublane-packed without masked handling.
        return _round_up(B, 16)
    if bm is None:
        # Per-grid-step overhead ~0.35 us; 512-row tiles sit near the HBM
        # roofline for modest K, 256 for large K to bound VMEM.
        bm = 512 if Kp <= 2048 else 256
    bm = max(128, _round_up(bm, 128))
    # Keep at least 2 batch tiles so ("parallel",) can split across v7x's 2 TCs.
    half = max(128, _round_up((B + 1) // 2, 128))
    return min(bm, half)


def mlp_regression_head(x, params, *, bm=None):
    """x: (B, in_features) f32. params: raw dict or prepare_params() output.
    Returns (B, 2) f32."""
    prepared = params if "w3t" in params else prepare_params(params)
    B, K = x.shape
    K0, H0, OUT, Kp, Hp, Op = prepared["dims"]
    assert K == K0, (K, K0)

    bm = _choose_bm(B, Kp, bm)

    # ---- generation-aware VMEM budget ----
    try:
        vmem_cap = pltpu.get_tpu_info().vmem_capacity_bytes
    except Exception:
        vmem_cap = 64 * 1024 * 1024          # conservative (v7x per-TC) fallback
    budget = int(0.6 * vmem_cap)

    def vmem_est(bm_):
        return int(2 * bm_ * Kp * 4                       # x f32 tile, double-buffered
                   + 2 * Op * bm_ * 4                     # out^T tile, double-buffered
                   + (Kp * Hp + Hp * Hp + Op * Hp) * 2    # bf16 weights (single buffer)
                   + (2 * Hp + Op) * 4                    # biases
                   + 4 * bm_ * Hp * 4)                    # live f32 intermediates

    while vmem_est(bm) > budget and bm > 128:
        bm = max(128, bm // 2)
    vmem_limit = int(min(max(int(1.25 * vmem_est(bm)), 16 * 1024 * 1024), budget))

    Bp = _round_up(B, bm)
    grid = (Bp // bm,)

    # Pad x only if needed (pure f32 zero-pad; no dtype conversion pass).
    xp = x if (Bp, Kp) == (B, K) else jnp.pad(x, ((0, Bp - B), (0, Kp - K)))

    flops = 2 * Bp * (Kp * Hp + Hp * Hp + Hp * Op)
    bytes_accessed = int(xp.size * 4
                         + (prepared["w1"].size + prepared["w2"].size
                            + prepared["w3t"].size) * 2
                         + (2 * Hp + Op) * 4
                         + Op * Bp * 4)

    out_t = pl.pallas_call(
        mlp_head_kernel,
        out_shape=jax.ShapeDtypeStruct((Op, Bp), jnp.float32),
        grid_spec=pltpu.PrefetchScalarGridSpec(
            num_scalar_prefetch=0,
            grid=grid,
            in_specs=[
                pl.BlockSpec((bm, Kp), lambda i: (i, 0)),   # x batch tile (f32)
                _const_spec((Kp, Hp)),                      # w1 (fetched once)
                _const_spec((1, Hp)),                       # b1
                _const_spec((Hp, Hp)),                      # w2
                _const_spec((1, Hp)),                       # b2
                _const_spec((Op, Hp)),                      # w3^T
                _const_spec((Op, 1)),                       # b3^T
            ],
            out_specs=pl.BlockSpec((Op, bm), lambda i: (0, i)),
        ),
        compiler_params=pltpu.CompilerParams(
            dimension_semantics=("parallel",),   # batch tiles are independent
            vmem_limit_bytes=vmem_limit,
        ),
        cost_estimate=pl.CostEstimate(
            flops=flops, transcendentals=0, bytes_accessed=bytes_accessed),
    )(xp, prepared["w1"], prepared["b1"], prepared["w2"], prepared["b2"],
      prepared["w3t"], prepared["b3t"])

    # Tiny (OUT, B) slice + transpose; negligible vs. the old full padded pass.
    return out_t[:OUT, :B].T


def init_params(key, in_features, hidden_dim=256):
    """Matches nn.Linear default init U(-1/sqrt(fan_in), 1/sqrt(fan_in)).
    Weights stored transposed, i.e. shape (in, out); biases (1, out)."""
    def linear(k, fan_in, fan_out):
        kw, kb = jax.random.split(k)
        bound = 1.0 / jnp.sqrt(fan_in)
        w = jax.random.uniform(kw, (fan_in, fan_out), jnp.float32, -bound, bound)
        b = jax.random.uniform(kb, (1, fan_out), jnp.float32, -bound, bound)
        return w, b

    k1, k2, k3 = jax.random.split(key, 3)
    w1, b1 = linear(k1, in_features, hidden_dim)
    w2, b2 = linear(k2, hidden_dim, hidden_dim)
    w3, b3 = linear(k3, hidden_dim, 2)
    return {"w1": w1, "b1": b1, "w2": w2, "b2": b2, "w3": w3, "b3": b3}


def mlp_regression_head_ref(x, p):
    h1 = jnp.maximum(x @ p["w1"] + p["b1"], 0.0)
    h2 = jnp.maximum(h1 @ p["w2"] + p["b2"], 0.0)
    return h2 @ p["w3"] + p["b3"]


if __name__ == "__main__":
    key = jax.random.PRNGKey(0)
    k_x, k_p = jax.random.split(key)

    batch = 8
    in_features = 16
    hidden_dim = 32

    x = jax.random.normal(k_x, (batch, in_features), jnp.float32)
    params = init_params(k_p, in_features, hidden_dim)

    prepared = prepare_params(params)          # pad + bf16-cast weights once
    out = mlp_regression_head(x, prepared)
    out = jax.block_until_ready(out)

    ref = mlp_regression_head_ref(x, params)
    assert out.shape == (batch, 2), out.shape
    # MXU runs in bf16 with f32 accumulation -> compare at bf16-level tolerance.
    max_err = float(jnp.max(jnp.abs(out - ref)))
    assert jnp.allclose(out, ref, atol=3e-2, rtol=3e-2), f"mismatch, max_err={max_err}"

    print("KERNEL_OK")
</pallas_src>

<mosaic_0001>
module attributes {stable_mosaic.version = 11 : i64} {
  func.func @mlp_head_kernel(%arg0: i32, %arg1: memref<16x128xf32, #tpu.memory_space<vmem>>, %arg2: memref<128x128xbf16, #tpu.memory_space<vmem>>, %arg3: memref<1x128xf32, #tpu.memory_space<vmem>>, %arg4: memref<128x128xbf16, #tpu.memory_space<vmem>>, %arg5: memref<1x128xf32, #tpu.memory_space<vmem>>, %arg6: memref<8x128xbf16, #tpu.memory_space<vmem>>, %arg7: memref<8x1xf32, #tpu.memory_space<vmem>>, %arg8: memref<8x16xf32, #tpu.memory_space<vmem>>) attributes {dimension_semantics = [#tpu.dimension_semantics<parallel>], iteration_bounds = array<i64: 1>, scalar_prefetch = 0 : i64, scratch_operands = 0 : i64, tpu.core_type = #tpu.core_type<tc>, window_params = [{transform_indices = @transform_0, window_bounds = array<i64: 16, 128>}, {pipeline_mode = #tpu.pipeline_mode<synchronous>, transform_indices = @transform_1, window_bounds = array<i64: 128, 128>}, {pipeline_mode = #tpu.pipeline_mode<synchronous>, transform_indices = @transform_2, window_bounds = array<i64: 1, 128>}, {pipeline_mode = #tpu.pipeline_mode<synchronous>, transform_indices = @transform_3, window_bounds = array<i64: 128, 128>}, {pipeline_mode = #tpu.pipeline_mode<synchronous>, transform_indices = @transform_4, window_bounds = array<i64: 1, 128>}, {pipeline_mode = #tpu.pipeline_mode<synchronous>, transform_indices = @transform_5, window_bounds = array<i64: 8, 128>}, {pipeline_mode = #tpu.pipeline_mode<synchronous>, transform_indices = @transform_6, window_bounds = array<i64: 8, 1>}, {transform_indices = @transform_7, window_bounds = array<i64: 8, 16>}]} {
    %c0 = arith.constant 0 : index
    %c0_0 = arith.constant 0 : index
    %0 = vector.load %arg1[%c0, %c0_0] : memref<16x128xf32, #tpu.memory_space<vmem>>, vector<16x128xf32>
    %1 = arith.truncf %0 : vector<16x128xf32> to vector<16x128xbf16>
    %c0_1 = arith.constant 0 : index
    %c0_2 = arith.constant 0 : index
    %2 = vector.load %arg2[%c0_1, %c0_2] : memref<128x128xbf16, #tpu.memory_space<vmem>>, vector<128x128xbf16>
    %cst = arith.constant dense<0.000000e+00> : vector<16x128xf32>
    %3 = tpu.matmul %1, %2, %cst {dimension_numbers = #tpu.dot_dimension_numbers<[1], [0], [0], [1], [0, 0, 1, 1], [], []>} : vector<16x128xbf16>, vector<128x128xbf16>, vector<16x128xf32> -> vector<16x128xf32>
    %c0_3 = arith.constant 0 : index
    %c0_4 = arith.constant 0 : index
    %4 = vector.load %arg3[%c0_3, %c0_4] : memref<1x128xf32, #tpu.memory_space<vmem>>, vector<1x128xf32>
    %5 = vector.broadcast %4 : vector<1x128xf32> to vector<16x128xf32>
    %6 = arith.addf %3, %5 : vector<16x128xf32>
    %cst_5 = arith.constant 0.000000e+00 : f32
    %7 = vector.broadcast %cst_5 : f32 to vector<16x128xf32>
    %8 = arith.maximumf %6, %7 : vector<16x128xf32>
    %9 = arith.truncf %8 : vector<16x128xf32> to vector<16x128xbf16>
    %c0_6 = arith.constant 0 : index
    %c0_7 = arith.constant 0 : index
    %10 = vector.load %arg4[%c0_6, %c0_7] : memref<128x128xbf16, #tpu.memory_space<vmem>>, vector<128x128xbf16>
    %cst_8 = arith.constant dense<0.000000e+00> : vector<16x128xf32>
    %11 = tpu.matmul %9, %10, %cst_8 {dimension_numbers = #tpu.dot_dimension_numbers<[1], [0], [0], [1], [0, 0, 1, 1], [], []>} : vector<16x128xbf16>, vector<128x128xbf16>, vector<16x128xf32> -> vector<16x128xf32>
    %c0_9 = arith.constant 0 : index
    %c0_10 = arith.constant 0 : index
    %12 = vector.load %arg5[%c0_9, %c0_10] : memref<1x128xf32, #tpu.memory_space<vmem>>, vector<1x128xf32>
    %13 = vector.broadcast %12 : vector<1x128xf32> to vector<16x128xf32>
    %14 = arith.addf %11, %13 : vector<16x128xf32>
    %cst_11 = arith.constant 0.000000e+00 : f32
    %15 = vector.broadcast %cst_11 : f32 to vector<16x128xf32>
    %16 = arith.maximumf %14, %15 : vector<16x128xf32>
    %17 = arith.truncf %16 : vector<16x128xf32> to vector<16x128xbf16>
    %c0_12 = arith.constant 0 : index
    %c0_13 = arith.constant 0 : index
    %18 = vector.load %arg6[%c0_12, %c0_13] : memref<8x128xbf16, #tpu.memory_space<vmem>>, vector<8x128xbf16>
    %cst_14 = arith.constant dense<0.000000e+00> : vector<8x16xf32>
    %19 = tpu.matmul %18, %17, %cst_14 {dimension_numbers = #tpu.dot_dimension_numbers<[1], [1], [0], [0], [0, 0, 1, 0], [], []>} : vector<8x128xbf16>, vector<16x128xbf16>, vector<8x16xf32> -> vector<8x16xf32>
    %c0_15 = arith.constant 0 : index
    %c0_16 = arith.constant 0 : index
    %20 = vector.load %arg7[%c0_15, %c0_16] : memref<8x1xf32, #tpu.memory_space<vmem>>, vector<8x1xf32>
    %21 = vector.broadcast %20 : vector<8x1xf32> to vector<8x16xf32>
    %22 = arith.addf %19, %21 : vector<8x16xf32>
    %c0_17 = arith.constant 0 : index
    %c0_18 = arith.constant 0 : index
    %23 = vector.load %arg8[%c0_17, %c0_18] : memref<8x16xf32, #tpu.memory_space<vmem>>, vector<8x16xf32>
    tpu.vector_store %arg8[%c0_17, %c0_18], %22 {strides = array<i32>} : memref<8x16xf32, #tpu.memory_space<vmem>>, vector<8x16xf32>,
    return
  }
  func.func @transform_0(%arg0: i32) -> (i32, i32) {
    %c0_i32 = arith.constant 0 : i32
    %c0_i32_0 = arith.constant 0 : i32
    return %arg0, %c0_i32 : i32, i32
  }
  func.func @transform_1(%arg0: i32) -> (i32, i32) {
    %c0_i32 = arith.constant 0 : i32
    %c0_i32_0 = arith.constant 0 : i32
    %c0_i32_1 = arith.constant 0 : i32
    return %c0_i32, %c0_i32_0 : i32, i32
  }
  func.func @transform_2(%arg0: i32) -> (i32, i32) {
    %c0_i32 = arith.constant 0 : i32
    %c0_i32_0 = arith.constant 0 : i32
    %c0_i32_1 = arith.constant 0 : i32
    return %c0_i32, %c0_i32_0 : i32, i32
  }
  func.func @transform_3(%arg0: i32) -> (i32, i32) {
    %c0_i32 = arith.constant 0 : i32
    %c0_i32_0 = arith.constant 0 : i32
    %c0_i32_1 = arith.constant 0 : i32
    return %c0_i32, %c0_i32_0 : i32, i32
  }
  func.func @transform_4(%arg0: i32) -> (i32, i32) {
    %c0_i32 = arith.constant 0 : i32
    %c0_i32_0 = arith.constant 0 : i32
    %c0_i32_1 = arith.constant 0 : i32
    return %c0_i32, %c0_i32_0 : i32, i32
  }
  func.func @transform_5(%arg0: i32) -> (i32, i32) {
    %c0_i32 = arith.constant 0 : i32
    %c0_i32_0 = arith.constant 0 : i32
    %c0_i32_1 = arith.constant 0 : i32
    return %c0_i32, %c0_i32_0 : i32, i32
  }
  func.func @transform_6(%arg0: i32) -> (i32, i32) {
    %c0_i32 = arith.constant 0 : i32
    %c0_i32_0 = arith.constant 0 : i32
    %c0_i32_1 = arith.constant 0 : i32
    return %c0_i32, %c0_i32_0 : i32, i32
  }
  func.func @transform_7(%arg0: i32) -> (i32, i32) {
    %c0_i32 = arith.constant 0 : i32
    %c0_i32_0 = arith.constant 0 : i32
    return %c0_i32, %arg0 : i32, i32
  }
}

</mosaic_0001>

<llo_original>
// kernel: tpu_custom_call.1
$region0: #{tpu_custom_call.1}
  #allocation0 [shape = 'u32[]', space=smem, size = 0x4, offset = 0x4, fixed_abs, tag = 'smem constant byte address 0x4 - core index']
  #allocation1 [shape = 'u32[72,128]{1,0:T(1,128)}', space=vmem, size = 0x9000, scoped, tag = 'internal scratch']
  %s0 = inlined_call_operand.hbm [shape: f32[16,128], index: 0, kind: input, shape index: {}]
  %s1 = inlined_call_operand.hbm [shape: bf16[128,128], index: 1, kind: input, shape index: {}]
  %s2 = inlined_call_operand.vmem [shape: f32[1,128], index: 2, kind: input, shape index: {}]
  %s3 = inlined_call_operand.hbm [shape: bf16[128,128], index: 3, kind: input, shape index: {}]
  %s4 = inlined_call_operand.vmem [shape: f32[1,128], index: 4, kind: input, shape index: {}]
  %s5 = inlined_call_operand.vmem [shape: bf16[8,128], index: 5, kind: input, shape index: {}]
  %s6 = inlined_call_operand.vmem [shape: f32[8,1], index: 6, kind: input, shape index: {}]
  %s7 = inlined_call_operand.hbm [shape: f32[8,16], index: 7, kind: output, shape index: {}]
  %s8 = sld [smem:[#allocation0]]
  $region50: #{tpu_custom_call.1} parent=0
    _
  %s10 = ssub.s32 1, %s8
  %s11 = scalar_select 0, %s10, %s8
  $region1: #{tpu_custom_call.1} parent=0
    #allocation2 [shape = 'u8[8192]{0}', space=vmem, size = 0x2000, scoped, tag = 'input window, operand 0, single buffered']
    #allocation3 [shape = 's32[1]{0}', space=sflag, size = 0x4, scoped, tag = 'scoped memory for tpu_custom_call.1']
    #allocation4 [shape = 's32[1]{0}', space=sflag, size = 0x4, scoped, tag = 'scoped memory for tpu_custom_call.1']
    #allocation5 [shape = 'u8[32768]{0}', space=vmem, size = 0x8000, scoped, tag = 'input window, operand 1, single buffered']
    #allocation6 [shape = 's32[1]{0}', space=sflag, size = 0x4, scoped, tag = 'scoped memory for tpu_custom_call.1']
    #allocation7 [shape = 'u8[32768]{0}', space=vmem, size = 0x8000, scoped, tag = 'input window, operand 3, single buffered']
    #allocation8 [shape = 'u8[4096]{0}', space=vmem, size = 0x1000, scoped, tag = 'output window, operand 0, single buffered']
    %12 = vsyncpa [#allocation3], 0
    %13 = vsyncpa [#allocation6], 0
    %14 = vsyncpa [#allocation4], 0
    // Predicated region
    $region2: #{tpu_custom_call.1} parent=1 // pred_check
      _
    $region3: #{tpu_custom_call.1} parent=1 // pred_check_branch
      %16 = sbr.rel (0) target = $region5
    $region4: #{tpu_custom_call.1} parent=1 // pred_region
      %18 = vsyncadd [#allocation3], 0
      %s19 = sshll.u32 %s0, 4
      %s20 = int_to_ptr.hbm [resolvable:$true] %s19
      %s21 = sshll.u32 [#allocation2], 4
      %s22 = int_to_ptr.vmem [resolvable:$true] %s21
      %27 = dma.hbm_to_vmem [thread:$0]  %s20, 256, %s22, [#allocation3], 128, 128, 8
    $region5: #{tpu_custom_call.1} parent=1 // pred_fallthru
      _
    // Predicated region
    $region6: #{tpu_custom_call.1} parent=1 // pred_check
      _
    $region7: #{tpu_custom_call.1} parent=1 // pred_check_branch
      %29 = sbr.rel (0) target = $region9
    $region8: #{tpu_custom_call.1} parent=1 // pred_region
      %31 = vsyncadd [#allocation6], 0
      %s32 = sshll.u32 %s1, 4
      %s33 = int_to_ptr.hbm [resolvable:$true] %s32
      %s34 = sshll.u32 [#allocation5], 4
      %s35 = int_to_ptr.vmem [resolvable:$true] %s34
      %40 = dma.hbm_to_vmem [thread:$0]  %s33, 1024, %s35, [#allocation6], 64, 64, 4
    $region9: #{tpu_custom_call.1} parent=1 // pred_fallthru
      _
    // Predicated region
    $region10: #{tpu_custom_call.1} parent=1 // pred_check
      _
    $region11: #{tpu_custom_call.1} parent=1 // pred_check_branch
      %42 = sbr.rel (0) target = $region13
    $region12: #{tpu_custom_call.1} parent=1 // pred_region
      _
    $region13: #{tpu_custom_call.1} parent=1 // pred_fallthru
      _
    // Predicated region
    $region14: #{tpu_custom_call.1} parent=1 // pred_check
      _
    $region15: #{tpu_custom_call.1} parent=1 // pred_check_branch
      %44 = sbr.rel (0) target = $region17
    $region16: #{tpu_custom_call.1} parent=1 // pred_region
      %46 = vsyncadd [#allocation6], 0
      %s47 = sshll.u32 %s3, 4
      %s48 = int_to_ptr.hbm [resolvable:$true] %s47
      %s49 = sshll.u32 [#allocation7], 4
      %s50 = int_to_ptr.vmem [resolvable:$true] %s49
      %55 = dma.hbm_to_vmem [thread:$0]  %s48, 1024, %s50, [#allocation6], 64, 64, 4
    $region17: #{tpu_custom_call.1} parent=1 // pred_fallthru
      _
    // Predicated region
    $region18: #{tpu_custom_call.1} parent=1 // pred_check
      _
    $region19: #{tpu_custom_call.1} parent=1 // pred_check_branch
      %57 = sbr.rel (0) target = $region21
    $region20: #{tpu_custom_call.1} parent=1 // pred_region
      _
    $region21: #{tpu_custom_call.1} parent=1 // pred_fallthru
      _
    // Predicated region
    $region22: #{tpu_custom_call.1} parent=1 // pred_check
      _
    $region23: #{tpu_custom_call.1} parent=1 // pred_check_branch
      %59 = sbr.rel (0) target = $region25
    $region24: #{tpu_custom_call.1} parent=1 // pred_region
      _
    $region25: #{tpu_custom_call.1} parent=1 // pred_fallthru
      _
    // Predicated region
    $region26: #{tpu_custom_call.1} parent=1 // pred_check
      _
    $region27: #{tpu_custom_call.1} parent=1 // pred_check_branch
      %61 = sbr.rel (0) target = $region29
    $region28: #{tpu_custom_call.1} parent=1 // pred_region
      _
    $region29: #{tpu_custom_call.1} parent=1 // pred_fallthru
      _
    // Predicated region
    $region30: #{tpu_custom_call.1} parent=1 // pred_check
      _
    $region31: #{tpu_custom_call.1} parent=1 // pred_check_branch
      %63 = sbr.rel (0) target = $region33
    $region32: #{tpu_custom_call.1} parent=1 // pred_region
      %65 = dma.done [#allocation3], 256
    $region33: #{tpu_custom_call.1} parent=1 // pred_fallthru
      _
    // Predicated region
    $region34: #{tpu_custom_call.1} parent=1 // pred_check
      _
    $region35: #{tpu_custom_call.1} parent=1 // pred_check_branch
      %67 = sbr.rel (0) target = $region37
    $region36: #{tpu_custom_call.1} parent=1 // pred_region
      %69 = dma.done [#allocation6], 1024
    $region37: #{tpu_custom_call.1} parent=1 // pred_fallthru
      _
    // Predicated region
    $region38: #{tpu_custom_call.1} parent=1 // pred_check
      _
    $region39: #{tpu_custom_call.1} parent=1 // pred_check_branch
      %71 = sbr.rel (0) target = $region41
    $region40: #{tpu_custom_call.1} parent=1 // pred_region
      %73 = dma.done [#allocation6], 1024
    $region41: #{tpu_custom_call.1} parent=1 // pred_fallthru
      _
    %v75 = vld [vmem:[#allocation2] sm:$0xff]
    %v76 = vld [vmem:[#allocation2 + $0x8] sm:$0xff]
    %v77 = vpack.c.bf16 %v76, %v75
    %v78 = vld [vmem:[#allocation5] sm:$0xf]
    %v79 = vld [vmem:[#allocation5 + $0x4] sm:$0xf]
    %v80 = vld [vmem:[#allocation5 + $0x8] sm:$0xf]
    %v81 = vld [vmem:[#allocation5 + $0xc] sm:$0xf]
    %v82 = vld [vmem:[#allocation5 + $0x10] sm:$0xf]
    %v83 = vld [vmem:[#allocation5 + $0x14] sm:$0xf]
    %v84 = vld [vmem:[#allocation5 + $0x18] sm:$0xf]
    %v85 = vld [vmem:[#allocation5 + $0x1c] sm:$0xf]
    %v86 = vld [vmem:[#allocation5 + $0x20] sm:$0xf]
    %v87 = vld [vmem:[#allocation5 + $0x24] sm:$0xf]
    %v88 = vld [vmem:[#allocation5 + $0x28] sm:$0xf]
    %v89 = vld [vmem:[#allocation5 + $0x2c] sm:$0xf]
    %v90 = vld [vmem:[#allocation5 + $0x30] sm:$0xf]
    %v91 = vld [vmem:[#allocation5 + $0x34] sm:$0xf]
    %v92 = vld [vmem:[#allocation5 + $0x38] sm:$0xf]
    %v93 = vld [vmem:[#allocation5 + $0x3c] sm:$0xf]
    %v94 = vld [vmem:[%s2] sm:$0x1]
    %v96 = vperm.slane %v94, 0
    %v114 = vunpack.c.l.b16 %v78
    %v115 = vunpack.c.l.b16 %v79
    %v116 = vunpack.c.l.b16 %v80
    %v117 = vunpack.c.l.b16 %v81
    %v118 = vunpack.c.l.b16 %v82
    %v119 = vunpack.c.l.b16 %v83
    %v120 = vunpack.c.l.b16 %v84
    %v121 = vunpack.c.l.b16 %v85
    %v122 = vunpack.c.l.b16 %v86
    %v123 = vunpack.c.l.b16 %v87
    %v124 = vunpack.c.l.b16 %v88
    %v125 = vunpack.c.l.b16 %v89
    %v126 = vunpack.c.l.b16 %v90
    %v127 = vunpack.c.l.b16 %v91
    %v128 = vunpack.c.l.b16 %v92
    %v129 = vunpack.c.l.b16 %v93
    %v130 = vpack.c.b16 %v115, %v114
    %v131 = vpack.c.b16 %v117, %v116
    %v132 = vpack.c.b16 %v119, %v118
    %v133 = vpack.c.b16 %v121, %v120
    %v134 = vpack.c.b16 %v123, %v122
    %v135 = vpack.c.b16 %v125, %v124
    %v136 = vpack.c.b16 %v127, %v126
    %v137 = vpack.c.b16 %v129, %v128
    %146 = vmatpush.bf16.msra.mxu0 %v137
    %147 = vmatpush.bf16.msra.mxu0 %v136
    %148 = vmatpush.bf16.msra.mxu0 %v135
    %149 = vmatpush.bf16.msra.mxu0 %v134
    %150 = vmatpush.bf16.msra.mxu0 %v133
    %151 = vmatpush.bf16.msra.mxu0 %v132
    %152 = vmatpush.bf16.msra.mxu0 %v131
    %153 = vmatpush.bf16.msra.mxu0 %v130
    %154 = vmatmul.bf16.gmra.mxu0 %v77
    %v155 = vpop.f32.mrf.mxu0
    %v156 = vadd.f32 %v96, %v155
    %v157 = vpop.f32.mrf.mxu0
    %v158 = vadd.f32 %v96, %v157
    %159 = vdwg.mxu0
    %v160 = vmax.f32 %v156, 0.0
    %v161 = vmax.f32 %v158, 0.0
    %v162 = vpack.c.bf16 %v161, %v160
    %v163 = vld [vmem:[#allocation7] sm:$0xf]
    %v164 = vld [vmem:[#allocation7 + $0x4] sm:$0xf]
    %v165 = vld [vmem:[#allocation7 + $0x8] sm:$0xf]
    %v166 = vld [vmem:[#allocation7 + $0xc] sm:$0xf]
    %v167 = vld [vmem:[#allocation7 + $0x10] sm:$0xf]
    %v168 = vld [vmem:[#allocation7 + $0x14] sm:$0xf]
    %v169 = vld [vmem:[#allocation7 + $0x18] sm:$0xf]
    %v170 = vld [vmem:[#allocation7 + $0x1c] sm:$0xf]
    %v171 = vld [vmem:[#allocation7 + $0x20] sm:$0xf]
    %v172 = vld [vmem:[#allocation7 + $0x24] sm:$0xf]
    %v173 = vld [vmem:[#allocation7 + $0x28] sm:$0xf]
    %v174 = vld [vmem:[#allocation7 + $0x2c] sm:$0xf]
    %v175 = vld [vmem:[#allocation7 + $0x30] sm:$0xf]
    %v176 = vld [vmem:[#allocation7 + $0x34] sm:$0xf]
    %v177 = vld [vmem:[#allocation7 + $0x38] sm:$0xf]
    %v178 = vld [vmem:[#allocation7 + $0x3c] sm:$0xf]
    %v179 = vld [vmem:[%s4] sm:$0x1]
    %v181 = vperm.slane %v179, 0
    %v199 = vunpack.c.l.b16 %v163
    %v200 = vunpack.c.l.b16 %v164
    %v201 = vunpack.c.l.b16 %v165
    %v202 = vunpack.c.l.b16 %v166
    %v203 = vunpack.c.l.b16 %v167
    %v204 = vunpack.c.l.b16 %v168
    %v205 = vunpack.c.l.b16 %v169
    %v206 = vunpack.c.l.b16 %v170
    %v207 = vunpack.c.l.b16 %v171
    %v208 = vunpack.c.l.b16 %v172
    %v209 = vunpack.c.l.b16 %v173
    %v210 = vunpack.c.l.b16 %v174
    %v211 = vunpack.c.l.b16 %v175
    %v212 = vunpack.c.l.b16 %v176
    %v213 = vunpack.c.l.b16 %v177
    %v214 = vunpack.c.l.b16 %v178
    %v215 = vpack.c.b16 %v200, %v199
    %v216 = vpack.c.b16 %v202, %v201
    %v217 = vpack.c.b16 %v204, %v203
    %v218 = vpack.c.b16 %v206, %v205
    %v219 = vpack.c.b16 %v208, %v207
    %v220 = vpack.c.b16 %v210, %v209
    %v221 = vpack.c.b16 %v212, %v211
    %v222 = vpack.c.b16 %v214, %v213
    %231 = vmatpush.bf16.msra.mxu0 %v222
    %232 = vmatpush.bf16.msra.mxu0 %v221
    %233 = vmatpush.bf16.msra.mxu0 %v220
    %234 = vmatpush.bf16.msra.mxu0 %v219
    %235 = vmatpush.bf16.msra.mxu0 %v218
    %236 = vmatpush.bf16.msra.mxu0 %v217
    %237 = vmatpush.bf16.msra.mxu0 %v216
    %238 = vmatpush.bf16.msra.mxu0 %v215
    %239 = vmatmul.bf16.gmra.mxu0 %v162
    %v240 = vpop.f32.mrf.mxu0
    %v241 = vadd.f32 %v181, %v240
    %v242 = vpop.f32.mrf.mxu0
    %v243 = vadd.f32 %v181, %v242
    %244 = vdwg.mxu0
    %v245 = vmax.f32 %v241, 0.0
    %v246 = vmax.f32 %v243, 0.0
    %v247 = vpack.c.bf16 %v246, %v245
    %v248 = vld [vmem:[%s5] sm:$0xf]
    %v249 = vld [vmem:[%s6] sm:$0xff]
    %251 = vset.pattern.permute.xlu0 0
    %252 = vperm.xlu0 %251, %v249
    %v253 = vpop.permute.xlu0 %252
    %255 = vmatpush.bf16.xpose.msra.mxu0 0
    %256 = vmatpush.bf16.xpose.msra.mxu0 0
    %257 = vmatpush.bf16.xpose.msra.mxu0 0
    %258 = vmatpush.bf16.xpose.msra.mxu0 0
    %259 = vmatpush.bf16.xpose.msra.mxu0 0
    %260 = vmatpush.bf16.xpose.msra.mxu0 0
    %261 = vmatpush.bf16.xpose.msra.mxu0 0
    %262 = vmatpush.bf16.xpose.msra.mxu0 %v247
    %263 = vmatmul.bf16.gmra.mxu0 %v248
    %v264 = vpop.f32.mrf.mxu0
    %v265 = vadd.f32 %v253, %v264
    %v266 = vpop.f32.mrf.mxu0
    %267 = vdwg.mxu0
    %vm268 = vcmask 130048
    %269 = vst.msk [vmem:[#allocation8] sm:$0xff] %vm268, %v265
    // Predicated region
    $region42: #{tpu_custom_call.1} parent=1 // pred_check
      _
    $region43: #{tpu_custom_call.1} parent=1 // pred_check_branch
      %271 = sbr.rel (0) target = $region45
    $region44: #{tpu_custom_call.1} parent=1 // pred_region
      %273 = vsyncadd [#allocation4], 0
      %s275 = sshll.u32 [#allocation8], 4
      %s276 = int_to_ptr.vmem [resolvable:$true] %s275
      %s277 = sshll.u32 %s7, 4
      %s278 = int_to_ptr.hbm [resolvable:$true] %s277
      %280 = dma.vmem_to_hbm [thread:$0]  %s276, 128, %s278, [#allocation4]
    $region45: #{tpu_custom_call.1} parent=1 // pred_fallthru
      _
    // Predicated region
    $region46: #{tpu_custom_call.1} parent=1 // pred_check
      _
    $region47: #{tpu_custom_call.1} parent=1 // pred_check_branch
      %282 = sbr.rel (0) target = $region49
    $region48: #{tpu_custom_call.1} parent=1 // pred_region
      %284 = dma.done [#allocation4], 128
    $region49: #{tpu_custom_call.1} parent=1 // pred_fallthru
      _
    %285 = vsyncpa [#allocation3], 1
    %286 = vsyncpa [#allocation6], 1
    %287 = vsyncpa [#allocation4], 1

</llo_original>
